<compile_context>
chip_gen: v7x
topology: tpu7x:2x2x1
jax: 0.10.0
libtpu: 0.0.40
codegen_flags: <defaults>
</compile_context>

<pallas_src>
import functools

import jax
import jax.numpy as jnp
from jax.experimental import pallas as pl
from jax.experimental.pallas import tpu as pltpu

SELU_ALPHA = 1.6732632423543772
SELU_SCALE = 1.0507009873554805


def _selu(x):
    # clamp the exp argument so the (selected-away) positive branch never
    # overflows; keeps EUP work bounded and avoids inf in the dead branch.
    neg = SELU_ALPHA * (jnp.exp(jnp.minimum(x, 0.0)) - 1.0)
    return SELU_SCALE * jnp.where(x > 0, x, neg)


def _round_up(v, m):
    return (v + m - 1) // m * m


def _stack_kernel(*refs, num_layers, apply_selu, use_bias):
    """refs = (x_ref, w0[, b0], w1[, b1], ..., o_ref). Whole stack fused."""
    x_ref = refs[0]
    o_ref = refs[-1]
    layer_refs = refs[1:-1]
    step = 2 if use_bias else 1

    x = x_ref[...].astype(jnp.float32)
    for li in range(num_layers):
        if apply_selu:
            x = _selu(x)                       # f32 on VPU/EUP
        w = layer_refs[li * step][...]         # bf16 [K_pad, N_pad]
        y = jnp.dot(x.astype(jnp.bfloat16), w,
                    preferred_element_type=jnp.float32)   # MXU bf16 -> f32 acc
        if use_bias:
            y = y + layer_refs[li * step + 1][...].astype(jnp.float32)
        x = y
    # TODO(synk): training-mode dropout (pltpu.prng_seed + prng_random_bits
    #             mask per tile) not implemented; dp is identity (inference).
    o_ref[...] = x.astype(o_ref.dtype)


def lin_stack_forward(x, params, *, act_bool, bias, dp=0.0, tm=128):
    """Fused forward of the whole linear stack.

    x: [M, in_dim] f32.  params: list of (w_t [d_in, d_out], b [1, d_out]).
    Intermediates never touch HBM; only the final (lane-dense, padded) slab is
    stored and then sliced back to [M, out_dim].
    """
    M, K = x.shape
    num_layers = len(params)
    out_dim = params[-1][0].shape[1]

    # batch tile: multiple of 8 sublanes, capped at `tm`; pad M to a multiple.
    tm_eff = min(tm, _round_up(M, 8))
    M_pad = _round_up(M, tm_eff)
    K_pad = _round_up(K, 128)
    N_pad = _round_up(out_dim, 128)

    x_p = jnp.zeros((M_pad, K_pad), jnp.float32).at[:M, :K].set(x)

    inputs = [x_p]
    in_specs = [pl.BlockSpec((tm_eff, K_pad), lambda i: (i, 0))]
    for w_t, b in params:
        d_in, d_out = w_t.shape
        d_in_p, d_out_p = _round_up(d_in, 128), _round_up(d_out, 128)
        # weights in bf16 (MXU-native), zero-padded to lane-dense tiles.
        w_p = jnp.zeros((d_in_p, d_out_p), jnp.bfloat16)
        w_p = w_p.at[:d_in, :d_out].set(w_t.astype(jnp.bfloat16))
        inputs.append(w_p)
        in_specs.append(pl.BlockSpec((d_in_p, d_out_p), lambda i: (0, 0)))
        if bias:
            b_p = jnp.zeros((1, d_out_p), jnp.float32).at[:, :d_out].set(b)
            inputs.append(b_p)
            in_specs.append(pl.BlockSpec((1, d_out_p), lambda i: (0, 0)))
        # (use_bias=False: no bias tensor allocated / DMA'd at all)

    kernel = functools.partial(_stack_kernel, num_layers=num_layers,
                               apply_selu=act_bool, use_bias=bias)
    out_p = pl.pallas_call(
        kernel,
        out_shape=jax.ShapeDtypeStruct((M_pad, N_pad), jnp.float32),
        grid=(M_pad // tm_eff,),
        in_specs=in_specs,
        out_specs=pl.BlockSpec((tm_eff, N_pad), lambda i: (i, 0)),
        compiler_params=pltpu.CompilerParams(
            dimension_semantics=("parallel",)),   # shards batch tiles across TCs
    )(*inputs)
    return out_p[:M, :out_dim]


def init_lin_stack_params(key, num_layers, in_dim, hidden_dim, out_dim, bias):
    """Deterministic param init (uniform +/- 1/sqrt(fan_in), like torch Linear)."""
    params = []
    for i in range(num_layers):
        d_in = hidden_dim if i > 0 else in_dim
        d_out = hidden_dim if i < num_layers - 1 else out_dim
        key, kw, kb = jax.random.split(key, 3)
        bound = 1.0 / jnp.sqrt(jnp.float32(d_in))
        # stored already transposed: [d_in, d_out]
        w_t = jax.random.uniform(kw, (d_in, d_out), jnp.float32, -bound, bound)
        if bias:
            b = jax.random.uniform(kb, (1, d_out), jnp.float32, -bound, bound)
        else:
            b = jnp.zeros((1, d_out), jnp.float32)
        params.append((w_t, b))
    return params


def lin_stack_reference(x, params, *, act_bool, bias):
    """Pure-JAX reference using the same numerics (bf16 MXU inputs, f32 acc)."""
    x = x.astype(jnp.float32)
    for w_t, b in params:
        if act_bool:
            x = _selu(x)
        y = jnp.dot(x.astype(jnp.bfloat16), w_t.astype(jnp.bfloat16),
                    preferred_element_type=jnp.float32)
        if bias:
            y = y + b
        x = y
    return x


if __name__ == "__main__":
    num_layers = 3
    in_dim, hidden_dim, out_dim = 32, 64, 16
    bias = True
    act_bool = True
    dp = 0.0
    batch = 8

    key = jax.random.PRNGKey(0)
    key, kx = jax.random.split(key)
    x = jax.random.normal(kx, (batch, in_dim), jnp.float32)

    params = init_lin_stack_params(key, num_layers, in_dim, hidden_dim,
                                   out_dim, bias)

    out = lin_stack_forward(x, params, act_bool=act_bool, bias=bias, dp=dp)
    out = jax.block_until_ready(out)

    ref = lin_stack_reference(x, params, act_bool=act_bool, bias=bias)
    assert out.shape == (batch, out_dim)
    assert jnp.allclose(out, ref, atol=1e-3, rtol=1e-3), "mismatch vs reference"

    print("KERNEL_OK")
</pallas_src>

<mosaic_0001>
module attributes {stable_mosaic.version = 11 : i64} {
  func.func @_stack_kernel(%arg0: i32, %arg1: memref<8x128xf32, #tpu.memory_space<vmem>>, %arg2: memref<128x128xbf16, #tpu.memory_space<vmem>>, %arg3: memref<1x128xf32, #tpu.memory_space<vmem>>, %arg4: memref<128x128xbf16, #tpu.memory_space<vmem>>, %arg5: memref<1x128xf32, #tpu.memory_space<vmem>>, %arg6: memref<128x128xbf16, #tpu.memory_space<vmem>>, %arg7: memref<1x128xf32, #tpu.memory_space<vmem>>, %arg8: memref<8x128xf32, #tpu.memory_space<vmem>>) attributes {dimension_semantics = [#tpu.dimension_semantics<parallel>], iteration_bounds = array<i64: 1>, scalar_prefetch = 0 : i64, scratch_operands = 0 : i64, tpu.core_type = #tpu.core_type<tc>, window_params = [{transform_indices = @transform_0, window_bounds = array<i64: 8, 128>}, {pipeline_mode = #tpu.pipeline_mode<synchronous>, transform_indices = @transform_1, window_bounds = array<i64: 128, 128>}, {pipeline_mode = #tpu.pipeline_mode<synchronous>, transform_indices = @transform_2, window_bounds = array<i64: 1, 128>}, {pipeline_mode = #tpu.pipeline_mode<synchronous>, transform_indices = @transform_3, window_bounds = array<i64: 128, 128>}, {pipeline_mode = #tpu.pipeline_mode<synchronous>, transform_indices = @transform_4, window_bounds = array<i64: 1, 128>}, {pipeline_mode = #tpu.pipeline_mode<synchronous>, transform_indices = @transform_5, window_bounds = array<i64: 128, 128>}, {pipeline_mode = #tpu.pipeline_mode<synchronous>, transform_indices = @transform_6, window_bounds = array<i64: 1, 128>}, {transform_indices = @transform_7, window_bounds = array<i64: 8, 128>}]} {
    %c0 = arith.constant 0 : index
    %c0_0 = arith.constant 0 : index
    %0 = vector.load %arg1[%c0, %c0_0] : memref<8x128xf32, #tpu.memory_space<vmem>>, vector<8x128xf32>
    %cst = arith.constant 0.000000e+00 : f32
    %1 = vector.broadcast %cst : f32 to vector<8x128xf32>
    %2 = arith.minimumf %0, %1 : vector<8x128xf32>
    %3 = math.exp %2 : vector<8x128xf32>
    %cst_1 = arith.constant 1.000000e+00 : f32
    %4 = vector.broadcast %cst_1 : f32 to vector<8x128xf32>
    %5 = arith.subf %3, %4 : vector<8x128xf32>
    %cst_2 = arith.constant 1.67326319 : f32
    %6 = vector.broadcast %cst_2 : f32 to vector<8x128xf32>
    %7 = arith.mulf %6, %5 : vector<8x128xf32>
    %cst_3 = arith.constant 0.000000e+00 : f32
    %8 = vector.broadcast %cst_3 : f32 to vector<8x128xf32>
    %9 = arith.cmpf ogt, %0, %8 : vector<8x128xf32>
    %10 = arith.select %9, %0, %7 : vector<8x128xi1>, vector<8x128xf32>
    %cst_4 = arith.constant 1.05070102 : f32
    %11 = vector.broadcast %cst_4 : f32 to vector<8x128xf32>
    %12 = arith.mulf %11, %10 : vector<8x128xf32>
    %c0_5 = arith.constant 0 : index
    %c0_6 = arith.constant 0 : index
    %13 = vector.load %arg2[%c0_5, %c0_6] : memref<128x128xbf16, #tpu.memory_space<vmem>>, vector<128x128xbf16>
    %14 = arith.truncf %12 : vector<8x128xf32> to vector<8x128xbf16>
    %cst_7 = arith.constant dense<0.000000e+00> : vector<8x128xf32>
    %15 = tpu.matmul %14, %13, %cst_7 {dimension_numbers = #tpu.dot_dimension_numbers<[1], [0], [0], [1], [0, 0, 1, 1], [], []>} : vector<8x128xbf16>, vector<128x128xbf16>, vector<8x128xf32> -> vector<8x128xf32>
    %c0_8 = arith.constant 0 : index
    %c0_9 = arith.constant 0 : index
    %16 = vector.load %arg3[%c0_8, %c0_9] : memref<1x128xf32, #tpu.memory_space<vmem>>, vector<1x128xf32>
    %17 = vector.broadcast %16 : vector<1x128xf32> to vector<8x128xf32>
    %18 = arith.addf %15, %17 : vector<8x128xf32>
    %cst_10 = arith.constant 0.000000e+00 : f32
    %19 = vector.broadcast %cst_10 : f32 to vector<8x128xf32>
    %20 = arith.minimumf %18, %19 : vector<8x128xf32>
    %21 = math.exp %20 : vector<8x128xf32>
    %cst_11 = arith.constant 1.000000e+00 : f32
    %22 = vector.broadcast %cst_11 : f32 to vector<8x128xf32>
    %23 = arith.subf %21, %22 : vector<8x128xf32>
    %cst_12 = arith.constant 1.67326319 : f32
    %24 = vector.broadcast %cst_12 : f32 to vector<8x128xf32>
    %25 = arith.mulf %24, %23 : vector<8x128xf32>
    %cst_13 = arith.constant 0.000000e+00 : f32
    %26 = vector.broadcast %cst_13 : f32 to vector<8x128xf32>
    %27 = arith.cmpf ogt, %18, %26 : vector<8x128xf32>
    %28 = arith.select %27, %18, %25 : vector<8x128xi1>, vector<8x128xf32>
    %cst_14 = arith.constant 1.05070102 : f32
    %29 = vector.broadcast %cst_14 : f32 to vector<8x128xf32>
    %30 = arith.mulf %29, %28 : vector<8x128xf32>
    %c0_15 = arith.constant 0 : index
    %c0_16 = arith.constant 0 : index
    %31 = vector.load %arg4[%c0_15, %c0_16] : memref<128x128xbf16, #tpu.memory_space<vmem>>, vector<128x128xbf16>
    %32 = arith.truncf %30 : vector<8x128xf32> to vector<8x128xbf16>
    %cst_17 = arith.constant dense<0.000000e+00> : vector<8x128xf32>
    %33 = tpu.matmul %32, %31, %cst_17 {dimension_numbers = #tpu.dot_dimension_numbers<[1], [0], [0], [1], [0, 0, 1, 1], [], []>} : vector<8x128xbf16>, vector<128x128xbf16>, vector<8x128xf32> -> vector<8x128xf32>
    %c0_18 = arith.constant 0 : index
    %c0_19 = arith.constant 0 : index
    %34 = vector.load %arg5[%c0_18, %c0_19] : memref<1x128xf32, #tpu.memory_space<vmem>>, vector<1x128xf32>
    %35 = vector.broadcast %34 : vector<1x128xf32> to vector<8x128xf32>
    %36 = arith.addf %33, %35 : vector<8x128xf32>
    %cst_20 = arith.constant 0.000000e+00 : f32
    %37 = vector.broadcast %cst_20 : f32 to vector<8x128xf32>
    %38 = arith.minimumf %36, %37 : vector<8x128xf32>
    %39 = math.exp %38 : vector<8x128xf32>
    %cst_21 = arith.constant 1.000000e+00 : f32
    %40 = vector.broadcast %cst_21 : f32 to vector<8x128xf32>
    %41 = arith.subf %39, %40 : vector<8x128xf32>
    %cst_22 = arith.constant 1.67326319 : f32
    %42 = vector.broadcast %cst_22 : f32 to vector<8x128xf32>
    %43 = arith.mulf %42, %41 : vector<8x128xf32>
    %cst_23 = arith.constant 0.000000e+00 : f32
    %44 = vector.broadcast %cst_23 : f32 to vector<8x128xf32>
    %45 = arith.cmpf ogt, %36, %44 : vector<8x128xf32>
    %46 = arith.select %45, %36, %43 : vector<8x128xi1>, vector<8x128xf32>
    %cst_24 = arith.constant 1.05070102 : f32
    %47 = vector.broadcast %cst_24 : f32 to vector<8x128xf32>
    %48 = arith.mulf %47, %46 : vector<8x128xf32>
    %c0_25 = arith.constant 0 : index
    %c0_26 = arith.constant 0 : index
    %49 = vector.load %arg6[%c0_25, %c0_26] : memref<128x128xbf16, #tpu.memory_space<vmem>>, vector<128x128xbf16>
    %50 = arith.truncf %48 : vector<8x128xf32> to vector<8x128xbf16>
    %cst_27 = arith.constant dense<0.000000e+00> : vector<8x128xf32>
    %51 = tpu.matmul %50, %49, %cst_27 {dimension_numbers = #tpu.dot_dimension_numbers<[1], [0], [0], [1], [0, 0, 1, 1], [], []>} : vector<8x128xbf16>, vector<128x128xbf16>, vector<8x128xf32> -> vector<8x128xf32>
    %c0_28 = arith.constant 0 : index
    %c0_29 = arith.constant 0 : index
    %52 = vector.load %arg7[%c0_28, %c0_29] : memref<1x128xf32, #tpu.memory_space<vmem>>, vector<1x128xf32>
    %53 = vector.broadcast %52 : vector<1x128xf32> to vector<8x128xf32>
    %54 = arith.addf %51, %53 : vector<8x128xf32>
    %c0_30 = arith.constant 0 : index
    %c0_31 = arith.constant 0 : index
    %55 = vector.load %arg8[%c0_30, %c0_31] : memref<8x128xf32, #tpu.memory_space<vmem>>, vector<8x128xf32>
    tpu.vector_store %arg8[%c0_30, %c0_31], %54 {strides = array<i32>} : memref<8x128xf32, #tpu.memory_space<vmem>>, vector<8x128xf32>,
    return
  }
  func.func @transform_0(%arg0: i32) -> (i32, i32) {
    %c0_i32 = arith.constant 0 : i32
    %c0_i32_0 = arith.constant 0 : i32
    return %arg0, %c0_i32 : i32, i32
  }
  func.func @transform_1(%arg0: i32) -> (i32, i32) {
    %c0_i32 = arith.constant 0 : i32
    %c0_i32_0 = arith.constant 0 : i32
    %c0_i32_1 = arith.constant 0 : i32
    return %c0_i32, %c0_i32_0 : i32, i32
  }
  func.func @transform_2(%arg0: i32) -> (i32, i32) {
    %c0_i32 = arith.constant 0 : i32
    %c0_i32_0 = arith.constant 0 : i32
    %c0_i32_1 = arith.constant 0 : i32
    return %c0_i32, %c0_i32_0 : i32, i32
  }
  func.func @transform_3(%arg0: i32) -> (i32, i32) {
    %c0_i32 = arith.constant 0 : i32
    %c0_i32_0 = arith.constant 0 : i32
    %c0_i32_1 = arith.constant 0 : i32
    return %c0_i32, %c0_i32_0 : i32, i32
  }
  func.func @transform_4(%arg0: i32) -> (i32, i32) {
    %c0_i32 = arith.constant 0 : i32
    %c0_i32_0 = arith.constant 0 : i32
    %c0_i32_1 = arith.constant 0 : i32
    return %c0_i32, %c0_i32_0 : i32, i32
  }
  func.func @transform_5(%arg0: i32) -> (i32, i32) {
    %c0_i32 = arith.constant 0 : i32
    %c0_i32_0 = arith.constant 0 : i32
    %c0_i32_1 = arith.constant 0 : i32
    return %c0_i32, %c0_i32_0 : i32, i32
  }
  func.func @transform_6(%arg0: i32) -> (i32, i32) {
    %c0_i32 = arith.constant 0 : i32
    %c0_i32_0 = arith.constant 0 : i32
    %c0_i32_1 = arith.constant 0 : i32
    return %c0_i32, %c0_i32_0 : i32, i32
  }
  func.func @transform_7(%arg0: i32) -> (i32, i32) {
    %c0_i32 = arith.constant 0 : i32
    %c0_i32_0 = arith.constant 0 : i32
    return %arg0, %c0_i32 : i32, i32
  }
}

</mosaic_0001>

<llo_original>
// kernel: tpu_custom_call.1
$region0: #{tpu_custom_call.1}
  #allocation0 [shape = 'u32[]', space=smem, size = 0x4, offset = 0x4, fixed_abs, tag = 'smem constant byte address 0x4 - core index']
  #allocation1 [shape = 'u32[144,128]{1,0:T(1,128)}', space=vmem, size = 0x12000, scoped, tag = 'internal scratch']
  %s0 = inlined_call_operand.hbm [shape: f32[8,128], index: 0, kind: input, shape index: {}]
  %s1 = inlined_call_operand.hbm [shape: bf16[128,128], index: 1, kind: input, shape index: {}]
  %s2 = inlined_call_operand.vmem [shape: f32[1,128], index: 2, kind: input, shape index: {}]
  %s3 = inlined_call_operand.hbm [shape: bf16[128,128], index: 3, kind: input, shape index: {}]
  %s4 = inlined_call_operand.vmem [shape: f32[1,128], index: 4, kind: input, shape index: {}]
  %s5 = inlined_call_operand.hbm [shape: bf16[128,128], index: 5, kind: input, shape index: {}]
  %s6 = inlined_call_operand.vmem [shape: f32[1,128], index: 6, kind: input, shape index: {}]
  %s7 = inlined_call_operand.hbm [shape: f32[8,128], index: 7, kind: output, shape index: {}]
  %s8 = sld [smem:[#allocation0]]
  $region54: #{tpu_custom_call.1} parent=0
    _
  %s10 = ssub.s32 1, %s8
  %s11 = scalar_select 0, %s10, %s8
  $region1: #{tpu_custom_call.1} parent=0
    #allocation2 [shape = 'u8[4096]{0}', space=vmem, size = 0x1000, scoped, tag = 'input window, operand 0, single buffered']
    #allocation3 [shape = 's32[1]{0}', space=sflag, size = 0x4, scoped, tag = 'scoped memory for tpu_custom_call.1']
    #allocation4 [shape = 's32[1]{0}', space=sflag, size = 0x4, scoped, tag = 'scoped memory for tpu_custom_call.1']
    #allocation5 [shape = 'u8[32768]{0}', space=vmem, size = 0x8000, scoped, tag = 'input window, operand 1, single buffered']
    #allocation6 [shape = 's32[1]{0}', space=sflag, size = 0x4, scoped, tag = 'scoped memory for tpu_custom_call.1']
    #allocation7 [shape = 'u8[32768]{0}', space=vmem, size = 0x8000, scoped, tag = 'input window, operand 3, single buffered']
    #allocation8 [shape = 'u8[32768]{0}', space=vmem, size = 0x8000, scoped, tag = 'input window, operand 5, single buffered']
    #allocation9 [shape = 's32[1]{0}', space=sflag, size = 0x4, scoped, tag = 'scoped memory for tpu_custom_call.1']
    #allocation10 [shape = 'u8[4096]{0}', space=vmem, size = 0x1000, scoped, tag = 'output window, operand 0, single buffered']
    %12 = vsyncpa [#allocation3], 0
    %13 = vsyncpa [#allocation6], 0
    %14 = vsyncpa [#allocation9], 0
    %15 = vsyncpa [#allocation4], 0
    // Predicated region
    $region2: #{tpu_custom_call.1} parent=1 // pred_check
      _
    $region3: #{tpu_custom_call.1} parent=1 // pred_check_branch
      %17 = sbr.rel (0) target = $region5
    $region4: #{tpu_custom_call.1} parent=1 // pred_region
      %s19 = ssub.s32 128, 128
      %20 = vsyncadd [#allocation3], %s19
      %s22 = sshll.u32 [#allocation2], 4
      %s23 = int_to_ptr.vmem [resolvable:$true] %s22
      %25 = dma.hbm_to_vmem [thread:$0]  %s0, 128, %s23, [#allocation3]
    $region5: #{tpu_custom_call.1} parent=1 // pred_fallthru
      _
    // Predicated region
    $region6: #{tpu_custom_call.1} parent=1 // pred_check
      _
    $region7: #{tpu_custom_call.1} parent=1 // pred_check_branch
      %27 = sbr.rel (0) target = $region9
    $region8: #{tpu_custom_call.1} parent=1 // pred_region
      %s29 = ssub.s32 1024, 1024
      %30 = vsyncadd [#allocation6], %s29
      %s31 = sshll.u32 [#allocation5], 4
      %s32 = int_to_ptr.vmem [resolvable:$true] %s31
      %37 = dma.hbm_to_vmem [thread:$0]  %s1, 1024, %s32, [#allocation6], 64, 64, 4
    $region9: #{tpu_custom_call.1} parent=1 // pred_fallthru
      _
    // Predicated region
    $region10: #{tpu_custom_call.1} parent=1 // pred_check
      _
    $region11: #{tpu_custom_call.1} parent=1 // pred_check_branch
      %39 = sbr.rel (0) target = $region13
    $region12: #{tpu_custom_call.1} parent=1 // pred_region
      _
    $region13: #{tpu_custom_call.1} parent=1 // pred_fallthru
      _
    // Predicated region
    $region14: #{tpu_custom_call.1} parent=1 // pred_check
      _
    $region15: #{tpu_custom_call.1} parent=1 // pred_check_branch
      %41 = sbr.rel (0) target = $region17
    $region16: #{tpu_custom_call.1} parent=1 // pred_region
      %s43 = ssub.s32 1024, 1024
      %44 = vsyncadd [#allocation6], %s43
      %s45 = sshll.u32 [#allocation7], 4
      %s46 = int_to_ptr.vmem [resolvable:$true] %s45
      %51 = dma.hbm_to_vmem [thread:$0]  %s3, 1024, %s46, [#allocation6], 64, 64, 4
    $region17: #{tpu_custom_call.1} parent=1 // pred_fallthru
      _
    // Predicated region
    $region18: #{tpu_custom_call.1} parent=1 // pred_check
      _
    $region19: #{tpu_custom_call.1} parent=1 // pred_check_branch
      %53 = sbr.rel (0) target = $region21
    $region20: #{tpu_custom_call.1} parent=1 // pred_region
      _
    $region21: #{tpu_custom_call.1} parent=1 // pred_fallthru
      _
    // Predicated region
    $region22: #{tpu_custom_call.1} parent=1 // pred_check
      _
    $region23: #{tpu_custom_call.1} parent=1 // pred_check_branch
      %55 = sbr.rel (0) target = $region25
    $region24: #{tpu_custom_call.1} parent=1 // pred_region
      %s57 = ssub.s32 1024, 1024
      %58 = vsyncadd [#allocation9], %s57
      %s59 = sshll.u32 [#allocation8], 4
      %s60 = int_to_ptr.vmem [resolvable:$true] %s59
      %65 = dma.hbm_to_vmem [thread:$0]  %s5, 1024, %s60, [#allocation9], 64, 64, 4
    $region25: #{tpu_custom_call.1} parent=1 // pred_fallthru
      _
    // Predicated region
    $region26: #{tpu_custom_call.1} parent=1 // pred_check
      _
    $region27: #{tpu_custom_call.1} parent=1 // pred_check_branch
      %67 = sbr.rel (0) target = $region29
    $region28: #{tpu_custom_call.1} parent=1 // pred_region
      _
    $region29: #{tpu_custom_call.1} parent=1 // pred_fallthru
      _
    // Predicated region
    $region30: #{tpu_custom_call.1} parent=1 // pred_check
      _
    $region31: #{tpu_custom_call.1} parent=1 // pred_check_branch
      %69 = sbr.rel (0) target = $region33
    $region32: #{tpu_custom_call.1} parent=1 // pred_region
      %70 = dma.done [#allocation3], 128
    $region33: #{tpu_custom_call.1} parent=1 // pred_fallthru
      _
    // Predicated region
    $region34: #{tpu_custom_call.1} parent=1 // pred_check
      _
    $region35: #{tpu_custom_call.1} parent=1 // pred_check_branch
      %72 = sbr.rel (0) target = $region37
    $region36: #{tpu_custom_call.1} parent=1 // pred_region
      %73 = dma.done [#allocation6], 1024
    $region37: #{tpu_custom_call.1} parent=1 // pred_fallthru
      _
    // Predicated region
    $region38: #{tpu_custom_call.1} parent=1 // pred_check
      _
    $region39: #{tpu_custom_call.1} parent=1 // pred_check_branch
      %75 = sbr.rel (0) target = $region41
    $region40: #{tpu_custom_call.1} parent=1 // pred_region
      %76 = dma.done [#allocation6], 1024
    $region41: #{tpu_custom_call.1} parent=1 // pred_fallthru
      _
    // Predicated region
    $region42: #{tpu_custom_call.1} parent=1 // pred_check
      _
    $region43: #{tpu_custom_call.1} parent=1 // pred_check_branch
      %78 = sbr.rel (0) target = $region45
    $region44: #{tpu_custom_call.1} parent=1 // pred_region
      %79 = dma.done [#allocation9], 1024
    $region45: #{tpu_custom_call.1} parent=1 // pred_fallthru
      _
    %v81 = vld [vmem:[#allocation2] sm:$0xff]
    %v82 = vmin.f32 %v81, 0.0
    %v83 = vmul.f32 %v82, 1.442695
    %v84 = vpow.pop %v83
    %v85 = vsub.f32 %v84, 1.0
    %v86 = vmul.f32 %v85, 1.6732632
    %vm87 = vcmp.gt.f32.partialorder %v81, 0.0
    %v88 = vsel %vm87, %v81, %v86
    %v89 = vmul.f32 %v88, 1.050701
    %v90 = vld [vmem:[#allocation5] sm:$0xf]
    %v91 = vld [vmem:[#allocation5 + $0x4] sm:$0xf]
    %v92 = vld [vmem:[#allocation5 + $0x8] sm:$0xf]
    %v93 = vld [vmem:[#allocation5 + $0xc] sm:$0xf]
    %v94 = vld [vmem:[#allocation5 + $0x10] sm:$0xf]
    %v95 = vld [vmem:[#allocation5 + $0x14] sm:$0xf]
    %v96 = vld [vmem:[#allocation5 + $0x18] sm:$0xf]
    %v97 = vld [vmem:[#allocation5 + $0x1c] sm:$0xf]
    %v98 = vld [vmem:[#allocation5 + $0x20] sm:$0xf]
    %v99 = vld [vmem:[#allocation5 + $0x24] sm:$0xf]
    %v100 = vld [vmem:[#allocation5 + $0x28] sm:$0xf]
    %v101 = vld [vmem:[#allocation5 + $0x2c] sm:$0xf]
    %v102 = vld [vmem:[#allocation5 + $0x30] sm:$0xf]
    %v103 = vld [vmem:[#allocation5 + $0x34] sm:$0xf]
    %v104 = vld [vmem:[#allocation5 + $0x38] sm:$0xf]
    %v105 = vld [vmem:[#allocation5 + $0x3c] sm:$0xf]
    %v106 = vpack.c.bf16 %v89, %v89
    %v107 = vld [vmem:[%s2] sm:$0x1]
    %v109 = vlaneseq
    %v110 = vshrl.u32 %v109, 7
    %v111 = vsub.s32 0, %v110
    %v112 = vrot.slane %v107, %v111
    %v130 = vunpack.c.l.b16 %v90
    %v131 = vunpack.c.l.b16 %v91
    %v132 = vunpack.c.l.b16 %v92
    %v133 = vunpack.c.l.b16 %v93
    %v134 = vunpack.c.l.b16 %v94
    %v135 = vunpack.c.l.b16 %v95
    %v136 = vunpack.c.l.b16 %v96
    %v137 = vunpack.c.l.b16 %v97
    %v138 = vunpack.c.l.b16 %v98
    %v139 = vunpack.c.l.b16 %v99
    %v140 = vunpack.c.l.b16 %v100
    %v141 = vunpack.c.l.b16 %v101
    %v142 = vunpack.c.l.b16 %v102
    %v143 = vunpack.c.l.b16 %v103
    %v144 = vunpack.c.l.b16 %v104
    %v145 = vunpack.c.l.b16 %v105
    %v146 = vpack.c.b16 %v131, %v130
    %v147 = vpack.c.b16 %v133, %v132
    %v148 = vpack.c.b16 %v135, %v134
    %v149 = vpack.c.b16 %v137, %v136
    %v150 = vpack.c.b16 %v139, %v138
    %v151 = vpack.c.b16 %v141, %v140
    %v152 = vpack.c.b16 %v143, %v142
    %v153 = vpack.c.b16 %v145, %v144
    %162 = vmatprep.subr.bf16.mxu0 0
    %163 = vmatpush1.bf16.msra.mxu0 %v146
    %164 = vmatprep.subr.bf16.mxu0 0
    %165 = vmatpush1.bf16.msra.mxu0 %v147
    %166 = vmatprep.subr.bf16.mxu0 0
    %167 = vmatpush1.bf16.msra.mxu0 %v148
    %168 = vmatprep.subr.bf16.mxu0 0
    %169 = vmatpush1.bf16.msra.mxu0 %v149
    %170 = vmatprep.subr.bf16.mxu0 0
    %171 = vmatpush1.bf16.msra.mxu0 %v150
    %172 = vmatprep.subr.bf16.mxu0 0
    %173 = vmatpush1.bf16.msra.mxu0 %v151
    %174 = vmatprep.subr.bf16.mxu0 0
    %175 = vmatpush1.bf16.msra.mxu0 %v152
    %176 = vmatprep.subr.bf16.mxu0 0
    %177 = vmatpush1.bf16.msra.mxu0 %v153
    %178 = vmatprep.subr.bf16.mxu0 0
    %179 = vmatpush1.bf16.msra.mxu0 0
    %180 = vmatprep.subr.bf16.mxu0 0
    %181 = vmatpush1.bf16.msra.mxu0 0
    %182 = vmatprep.subr.bf16.mxu0 0
    %183 = vmatpush1.bf16.msra.mxu0 0
    %184 = vmatprep.subr.bf16.mxu0 0
    %185 = vmatpush1.bf16.msra.mxu0 0
    %186 = vmatprep.subr.bf16.mxu0 0
    %187 = vmatpush1.bf16.msra.mxu0 0
    %188 = vmatprep.subr.bf16.mxu0 0
    %189 = vmatpush1.bf16.msra.mxu0 0
    %190 = vmatprep.subr.bf16.mxu0 0
    %191 = vmatpush1.bf16.msra.mxu0 0
    %192 = vmatprep.subr.bf16.mxu0 0
    %193 = vmatpush1.bf16.msra.mxu0 0
    %194 = vmatprep.mubr.bf16.mxu0 0
    %195 = vmatmul.mubr.bf16.gmra.mrb[0].mxu0 %v106
    %v196 = vpop.f32.mrb[0].mxu0
    %v197 = vadd.f32 %v112, %v196
    %v198 = vpop.f32.mrb[0].mxu0
    %v199 = vpop.f32.mrb[0].mxu0
    %v200 = vpop.f32.mrb[0].mxu0
    %201 = vdwg.mxu0
    %v202 = vmin.f32 %v197, 0.0
    %v203 = vmul.f32 %v202, 1.442695
    %v204 = vpow.pop %v203
    %v205 = vsub.f32 %v204, 1.0
    %v206 = vmul.f32 %v205, 1.6732632
    %vm207 = vcmp.gt.f32.partialorder %v197, 0.0
    %v208 = vsel %vm207, %v197, %v206
    %v209 = vmul.f32 %v208, 1.050701
    %v210 = vld [vmem:[#allocation7] sm:$0xf]
    %v211 = vld [vmem:[#allocation7 + $0x4] sm:$0xf]
    %v212 = vld [vmem:[#allocation7 + $0x8] sm:$0xf]
    %v213 = vld [vmem:[#allocation7 + $0xc] sm:$0xf]
    %v214 = vld [vmem:[#allocation7 + $0x10] sm:$0xf]
    %v215 = vld [vmem:[#allocation7 + $0x14] sm:$0xf]
    %v216 = vld [vmem:[#allocation7 + $0x18] sm:$0xf]
    %v217 = vld [vmem:[#allocation7 + $0x1c] sm:$0xf]
    %v218 = vld [vmem:[#allocation7 + $0x20] sm:$0xf]
    %v219 = vld [vmem:[#allocation7 + $0x24] sm:$0xf]
    %v220 = vld [vmem:[#allocation7 + $0x28] sm:$0xf]
    %v221 = vld [vmem:[#allocation7 + $0x2c] sm:$0xf]
    %v222 = vld [vmem:[#allocation7 + $0x30] sm:$0xf]
    %v223 = vld [vmem:[#allocation7 + $0x34] sm:$0xf]
    %v224 = vld [vmem:[#allocation7 + $0x38] sm:$0xf]
    %v225 = vld [vmem:[#allocation7 + $0x3c] sm:$0xf]
    %v226 = vpack.c.bf16 %v209, %v209
    %v227 = vld [vmem:[%s4] sm:$0x1]
    %v229 = vlaneseq
    %v230 = vshrl.u32 %v229, 7
    %v231 = vsub.s32 0, %v230
    %v232 = vrot.slane %v227, %v231
    %v250 = vunpack.c.l.b16 %v210
    %v251 = vunpack.c.l.b16 %v211
    %v252 = vunpack.c.l.b16 %v212
    %v253 = vunpack.c.l.b16 %v213
    %v254 = vunpack.c.l.b16 %v214
    %v255 = vunpack.c.l.b16 %v215
    %v256 = vunpack.c.l.b16 %v216
    %v257 = vunpack.c.l.b16 %v217
    %v258 = vunpack.c.l.b16 %v218
    %v259 = vunpack.c.l.b16 %v219
    %v260 = vunpack.c.l.b16 %v220
    %v261 = vunpack.c.l.b16 %v221
    %v262 = vunpack.c.l.b16 %v222
    %v263 = vunpack.c.l.b16 %v223
    %v264 = vunpack.c.l.b16 %v224
    %v265 = vunpack.c.l.b16 %v225
    %v266 = vpack.c.b16 %v251, %v250
    %v267 = vpack.c.b16 %v253, %v252
    %v268 = vpack.c.b16 %v255, %v254
    %v269 = vpack.c.b16 %v257, %v256
    %v270 = vpack.c.b16 %v259, %v258
    %v271 = vpack.c.b16 %v261, %v260
    %v272 = vpack.c.b16 %v263, %v262
    %v273 = vpack.c.b16 %v265, %v264
    %282 = vmatprep.subr.bf16.mxu0 0
    %283 = vmatpush1.bf16.msra.mxu0 %v266
    %284 = vmatprep.subr.bf16.mxu0 0
    %285 = vmatpush1.bf16.msra.mxu0 %v267
    %286 = vmatprep.subr.bf16.mxu0 0
    %287 = vmatpush1.bf16.msra.mxu0 %v268
    %288 = vmatprep.subr.bf16.mxu0 0
    %289 = vmatpush1.bf16.msra.mxu0 %v269
    %290 = vmatprep.subr.bf16.mxu0 0
    %291 = vmatpush1.bf16.msra.mxu0 %v270
    %292 = vmatprep.subr.bf16.mxu0 0
    %293 = vmatpush1.bf16.msra.mxu0 %v271
    %294 = vmatprep.subr.bf16.mxu0 0
    %295 = vmatpush1.bf16.msra.mxu0 %v272
    %296 = vmatprep.subr.bf16.mxu0 0
    %297 = vmatpush1.bf16.msra.mxu0 %v273
    %298 = vmatprep.subr.bf16.mxu0 0
    %299 = vmatpush1.bf16.msra.mxu0 0
    %300 = vmatprep.subr.bf16.mxu0 0
    %301 = vmatpush1.bf16.msra.mxu0 0
    %302 = vmatprep.subr.bf16.mxu0 0
    %303 = vmatpush1.bf16.msra.mxu0 0
    %304 = vmatprep.subr.bf16.mxu0 0
    %305 = vmatpush1.bf16.msra.mxu0 0
    %306 = vmatprep.subr.bf16.mxu0 0
    %307 = vmatpush1.bf16.msra.mxu0 0
    %308 = vmatprep.subr.bf16.mxu0 0
    %309 = vmatpush1.bf16.msra.mxu0 0
    %310 = vmatprep.subr.bf16.mxu0 0
    %311 = vmatpush1.bf16.msra.mxu0 0
    %312 = vmatprep.subr.bf16.mxu0 0
    %313 = vmatpush1.bf16.msra.mxu0 0
    %314 = vmatprep.mubr.bf16.mxu0 0
    %315 = vmatmul.mubr.bf16.gmra.mrb[0].mxu0 %v226
    %v316 = vpop.f32.mrb[0].mxu0
    %v317 = vadd.f32 %v232, %v316
    %v318 = vpop.f32.mrb[0].mxu0
    %v319 = vpop.f32.mrb[0].mxu0
    %v320 = vpop.f32.mrb[0].mxu0
    %321 = vdwg.mxu0
    %v322 = vmin.f32 %v317, 0.0
    %v323 = vmul.f32 %v322, 1.442695
    %v324 = vpow.pop %v323
    %v325 = vsub.f32 %v324, 1.0
    %v326 = vmul.f32 %v325, 1.6732632
    %vm327 = vcmp.gt.f32.partialorder %v317, 0.0
    %v328 = vsel %vm327, %v317, %v326
    %v329 = vmul.f32 %v328, 1.050701
    %v330 = vld [vmem:[#allocation8] sm:$0xf]
    %v331 = vld [vmem:[#allocation8 + $0x4] sm:$0xf]
    %v332 = vld [vmem:[#allocation8 + $0x8] sm:$0xf]
    %v333 = vld [vmem:[#allocation8 + $0xc] sm:$0xf]
    %v334 = vld [vmem:[#allocation8 + $0x10] sm:$0xf]
    %v335 = vld [vmem:[#allocation8 + $0x14] sm:$0xf]
    %v336 = vld [vmem:[#allocation8 + $0x18] sm:$0xf]
    %v337 = vld [vmem:[#allocation8 + $0x1c] sm:$0xf]
    %v338 = vld [vmem:[#allocation8 + $0x20] sm:$0xf]
    %v339 = vld [vmem:[#allocation8 + $0x24] sm:$0xf]
    %v340 = vld [vmem:[#allocation8 + $0x28] sm:$0xf]
    %v341 = vld [vmem:[#allocation8 + $0x2c] sm:$0xf]
    %v342 = vld [vmem:[#allocation8 + $0x30] sm:$0xf]
    %v343 = vld [vmem:[#allocation8 + $0x34] sm:$0xf]
    %v344 = vld [vmem:[#allocation8 + $0x38] sm:$0xf]
    %v345 = vld [vmem:[#allocation8 + $0x3c] sm:$0xf]
    %v346 = vpack.c.bf16 %v329, %v329
    %v347 = vld [vmem:[%s6] sm:$0x1]
    %v349 = vlaneseq
    %v350 = vshrl.u32 %v349, 7
    %v351 = vsub.s32 0, %v350
    %v352 = vrot.slane %v347, %v351
    %v370 = vunpack.c.l.b16 %v330
    %v371 = vunpack.c.l.b16 %v331
    %v372 = vunpack.c.l.b16 %v332
    %v373 = vunpack.c.l.b16 %v333
    %v374 = vunpack.c.l.b16 %v334
    %v375 = vunpack.c.l.b16 %v335
    %v376 = vunpack.c.l.b16 %v336
    %v377 = vunpack.c.l.b16 %v337
    %v378 = vunpack.c.l.b16 %v338
    %v379 = vunpack.c.l.b16 %v339
    %v380 = vunpack.c.l.b16 %v340
    %v381 = vunpack.c.l.b16 %v341
    %v382 = vunpack.c.l.b16 %v342
    %v383 = vunpack.c.l.b16 %v343
    %v384 = vunpack.c.l.b16 %v344
    %v385 = vunpack.c.l.b16 %v345
    %v386 = vpack.c.b16 %v371, %v370
    %v387 = vpack.c.b16 %v373, %v372
    %v388 = vpack.c.b16 %v375, %v374
    %v389 = vpack.c.b16 %v377, %v376
    %v390 = vpack.c.b16 %v379, %v378
    %v391 = vpack.c.b16 %v381, %v380
    %v392 = vpack.c.b16 %v383, %v382
    %v393 = vpack.c.b16 %v385, %v384
    %402 = vmatprep.subr.bf16.mxu0 0
    %403 = vmatpush1.bf16.msra.mxu0 %v386
    %404 = vmatprep.subr.bf16.mxu0 0
    %405 = vmatpush1.bf16.msra.mxu0 %v387
    %406 = vmatprep.subr.bf16.mxu0 0
    %407 = vmatpush1.bf16.msra.mxu0 %v388
    %408 = vmatprep.subr.bf16.mxu0 0
    %409 = vmatpush1.bf16.msra.mxu0 %v389
    %410 = vmatprep.subr.bf16.mxu0 0
    %411 = vmatpush1.bf16.msra.mxu0 %v390
    %412 = vmatprep.subr.bf16.mxu0 0
    %413 = vmatpush1.bf16.msra.mxu0 %v391
    %414 = vmatprep.subr.bf16.mxu0 0
    %415 = vmatpush1.bf16.msra.mxu0 %v392
    %416 = vmatprep.subr.bf16.mxu0 0
    %417 = vmatpush1.bf16.msra.mxu0 %v393
    %418 = vmatprep.subr.bf16.mxu0 0
    %419 = vmatpush1.bf16.msra.mxu0 0
    %420 = vmatprep.subr.bf16.mxu0 0
    %421 = vmatpush1.bf16.msra.mxu0 0
    %422 = vmatprep.subr.bf16.mxu0 0
    %423 = vmatpush1.bf16.msra.mxu0 0
    %424 = vmatprep.subr.bf16.mxu0 0
    %425 = vmatpush1.bf16.msra.mxu0 0
    %426 = vmatprep.subr.bf16.mxu0 0
    %427 = vmatpush1.bf16.msra.mxu0 0
    %428 = vmatprep.subr.bf16.mxu0 0
    %429 = vmatpush1.bf16.msra.mxu0 0
    %430 = vmatprep.subr.bf16.mxu0 0
    %431 = vmatpush1.bf16.msra.mxu0 0
    %432 = vmatprep.subr.bf16.mxu0 0
    %433 = vmatpush1.bf16.msra.mxu0 0
    %434 = vmatprep.mubr.bf16.mxu0 0
    %435 = vmatmul.mubr.bf16.gmra.mrb[0].mxu0 %v346
    %v436 = vpop.f32.mrb[0].mxu0
    %v437 = vadd.f32 %v352, %v436
    %v438 = vpop.f32.mrb[0].mxu0
    %v439 = vpop.f32.mrb[0].mxu0
    %v440 = vpop.f32.mrb[0].mxu0
    %441 = vdwg.mxu0
    %442 = vst [vmem:[#allocation10] sm:$0xff] %v437
    // Predicated region
    $region46: #{tpu_custom_call.1} parent=1 // pred_check
      _
    $region47: #{tpu_custom_call.1} parent=1 // pred_check_branch
      %444 = sbr.rel (0) target = $region49
    $region48: #{tpu_custom_call.1} parent=1 // pred_region
      %s446 = ssub.s32 128, 128
      %447 = vsyncadd [#allocation4], %s446
      %s449 = sshll.u32 [#allocation10], 4
      %s450 = int_to_ptr.vmem [resolvable:$true] %s449
      %452 = dma.vmem_to_hbm [thread:$0]  %s450, 128, %s7, [#allocation4]
    $region49: #{tpu_custom_call.1} parent=1 // pred_fallthru
      _
    // Predicated region
    $region50: #{tpu_custom_call.1} parent=1 // pred_check
      _
    $region51: #{tpu_custom_call.1} parent=1 // pred_check_branch
      %454 = sbr.rel (0) target = $region53
    $region52: #{tpu_custom_call.1} parent=1 // pred_region
      %455 = dma.done [#allocation4], 128
    $region53: #{tpu_custom_call.1} parent=1 // pred_fallthru
      _
    %456 = vsyncpa [#allocation3], 1
    %457 = vsyncpa [#allocation6], 1
    %458 = vsyncpa [#allocation9], 1
    %459 = vsyncpa [#allocation4], 1

</llo_original>
